<compile_context>
chip_gen: v6e
topology: v6e:2x2x1
jax: 0.10.0
libtpu: 0.0.40
codegen_flags: <defaults>
</compile_context>

<pallas_src>
import jax
import jax.numpy as jnp
from jax.experimental import pallas as pl
from jax.experimental.pallas import tpu as pltpu


def _embed_onehot_kernel(ids_ref, tbl_ref, out_ref):
    # ids_ref : (T, 2) int32 -- col 0 = word id, col 1 = extword id + Vw
    # tbl_ref : (Kpad, D) bf16 -- concatenated + padded table, VMEM resident
    # out_ref : (T, D) output slab
    T = out_ref.shape[0]
    K = tbl_ref.shape[0]

    ids = ids_ref[...]                      # (T, 2) int32
    wid = ids[:, 0:1]                       # (T, 1)
    eid = ids[:, 1:2]                       # (T, 1)

    # Combined one-hot built on the VPU; the "gather" runs as one (T, K) x
    # (K, D) bf16 matmul on the otherwise-idle MXU with f32 accumulation.
    # Out-of-range ids match nothing -> zero vector.
    col = jax.lax.broadcasted_iota(jnp.int32, (T, K), 1)
    onehot = jnp.logical_or(col == wid, col == eid).astype(tbl_ref.dtype)

    acc = jnp.dot(onehot, tbl_ref[...], preferred_element_type=jnp.float32)
    out_ref[...] = acc.astype(out_ref.dtype)


def embedding_forward(word_ids, extword_ids, word_table, extword_table,
                      *, tokens_per_tile=512, out_dtype=jnp.float32):
    """Eval-mode forward: lookup both tables and add.

    word_ids, extword_ids: [B, S] int
    word_table:            [Vw, D] float32
    extword_table:         [Ve, D] float32
    returns:               [B, S, D] out_dtype (default float32; pass
                           jnp.bfloat16 if the downstream stack is bf16 to
                           halve writeback bytes)
    """
    B, S = word_ids.shape
    Vw, D = word_table.shape
    Ve, D2 = extword_table.shape
    assert D == D2

    # ---- pack the two tables into one MXU-friendly bf16 table (done once) ----
    K = Vw + Ve
    Kpad = ((K + 255) // 256) * 256          # fill the 256-deep v6e/v7x MXU
    table = jnp.concatenate([word_table, extword_table], axis=0)
    table = table.astype(jnp.bfloat16)
    if Kpad != K:
        table = jnp.pad(table, ((0, Kpad - K), (0, 0)))

    # ---- tile selection ----
    N = B * S
    tpt = max(8, (tokens_per_tile // 8) * 8)
    if N <= tpt:
        T = max(8, ((N + 7) // 8) * 8)       # single small tile for tiny inputs
    else:
        T = tpt
    num_tiles = pl.cdiv(N, T)
    N_pad = num_tiles * T

    # ---- packed id stream: col 0 = word id, col 1 = extword id + Vw ----
    wids = word_ids.reshape(N).astype(jnp.int32)
    eids = extword_ids.reshape(N).astype(jnp.int32) + Vw
    ids = jnp.stack([wids, eids], axis=-1)   # (N, 2)
    if N_pad != N:                           # skip pad round-trip when aligned
        ids = jnp.pad(ids, ((0, N_pad - N), (0, 0)))

    out_bytes = jnp.dtype(out_dtype).itemsize
    cost = pl.CostEstimate(
        flops=2 * N_pad * Kpad * D,
        transcendentals=0,
        bytes_accessed=N_pad * D * out_bytes + N_pad * 2 * 4 + Kpad * D * 2,
    )

    # ---- VMEM budget (per TensorCore; v7x has 64 MiB physical) ----
    table_bytes = Kpad * D * 2                       # resident bf16 table
    block_out_bytes = 2 * T * D * out_bytes          # double-buffered out
    block_id_bytes = 2 * T * 2 * 4                   # double-buffered ids
    onehot_bytes = 3 * T * Kpad * 4                  # iota + mask + bf16 onehot
    acc_bytes = T * D * 4                            # f32 matmul result
    vmem_budget = (table_bytes + block_out_bytes + block_id_bytes
                   + onehot_bytes + acc_bytes)
    vmem_limit = min(64 << 20, max(32 << 20, 2 * vmem_budget))

    out_flat = pl.pallas_call(
        _embed_onehot_kernel,
        out_shape=jax.ShapeDtypeStruct((N_pad, D), out_dtype),
        grid=(num_tiles,),
        in_specs=[
            # packed (T, 2) id tile: one small DMA per step
            pl.BlockSpec((T, 2), lambda i: (i, 0)),
            # concatenated table: fully resident in VMEM, no per-step DMA
            pl.BlockSpec(memory_space=pltpu.MemorySpace.VMEM),
        ],
        out_specs=pl.BlockSpec((T, D), lambda i: (i, 0)),
        compiler_params=pltpu.CompilerParams(
            dimension_semantics=("parallel",),
            vmem_limit_bytes=vmem_limit),
        cost_estimate=cost,
    )(ids, table)

    if N_pad != N:                           # skip output slice when aligned
        out_flat = out_flat[:N]
    return out_flat.reshape(B, S, D)


if __name__ == "__main__":
    # Small, deterministic example shapes.
    word_size, extword_size, word_dims = 64, 80, 128
    B, S = 2, 8

    key = jax.random.PRNGKey(0)
    k1, k2, k3, k4 = jax.random.split(key, 4)

    word_table = jax.random.normal(k1, (word_size, word_dims), jnp.float32) * 0.1
    extword_table = jax.random.normal(k2, (extword_size, word_dims), jnp.float32) * 0.1
    # padding_idx=0 rows are zero
    word_table = word_table.at[0].set(0.0)
    extword_table = extword_table.at[0].set(0.0)

    word_ids = jax.random.randint(k3, (B, S), 0, word_size, dtype=jnp.int32)
    extword_ids = jax.random.randint(k4, (B, S), 0, extword_size, dtype=jnp.int32)

    out = embedding_forward(word_ids, extword_ids, word_table, extword_table)
    out = jax.block_until_ready(out)

    # pure-JAX reference check (tables are bf16-rounded inside the kernel,
    # accumulation is f32 -> compare against a bf16-cast reference).
    w_bf = word_table.astype(jnp.bfloat16).astype(jnp.float32)
    e_bf = extword_table.astype(jnp.bfloat16).astype(jnp.float32)
    ref = (jnp.take(w_bf, word_ids, axis=0)
           + jnp.take(e_bf, extword_ids, axis=0))
    assert out.shape == (B, S, word_dims)
    assert jnp.allclose(out, ref, atol=1e-5, rtol=1e-5), "mismatch vs reference"

    print("KERNEL_OK")
</pallas_src>

<mosaic_0001>
module attributes {stable_mosaic.version = 11 : i64} {
  func.func @_embed_onehot_kernel(%arg0: i32, %arg1: memref<16x2xi32, #tpu.memory_space<vmem>>, %arg2: memref<256x128xbf16, #tpu.memory_space<vmem>>, %arg3: memref<16x128xf32, #tpu.memory_space<vmem>>) attributes {dimension_semantics = [#tpu.dimension_semantics<parallel>], iteration_bounds = array<i64: 1>, scalar_prefetch = 0 : i64, scratch_operands = 0 : i64, tpu.core_type = #tpu.core_type<tc>, window_params = [{transform_indices = @transform_0, window_bounds = array<i64: 16, 2>}, {pipeline_mode = #tpu.pipeline_mode<synchronous>, transform_indices = @transform_1, window_bounds = array<i64: 256, 128>}, {transform_indices = @transform_2, window_bounds = array<i64: 16, 128>}]} {
    %c0 = arith.constant 0 : index
    %c0_0 = arith.constant 0 : index
    %0 = vector.load %arg1[%c0, %c0_0] : memref<16x2xi32, #tpu.memory_space<vmem>>, vector<16x2xi32>
    %1 = vector.extract_strided_slice %0 {offsets = [0, 0], sizes = [16, 1], strides = [1, 1]} : vector<16x2xi32> to vector<16x1xi32>
    %2 = vector.extract_strided_slice %0 {offsets = [0, 1], sizes = [16, 1], strides = [1, 1]} : vector<16x2xi32> to vector<16x1xi32>
    %3 = tpu.iota {dimensions = array<i32: 1>} : vector<16x256xi32>
    %4 = vector.broadcast %1 : vector<16x1xi32> to vector<16x256xi32>
    %5 = arith.cmpi eq, %3, %4 : vector<16x256xi32>
    %6 = vector.broadcast %2 : vector<16x1xi32> to vector<16x256xi32>
    %7 = arith.cmpi eq, %3, %6 : vector<16x256xi32>
    %8 = arith.ori %5, %7 : vector<16x256xi1>
    %9 = arith.extui %8 : vector<16x256xi1> to vector<16x256xi32>
    %10 = arith.sitofp %9 : vector<16x256xi32> to vector<16x256xf32>
    %11 = arith.truncf %10 : vector<16x256xf32> to vector<16x256xbf16>
    %c0_1 = arith.constant 0 : index
    %c0_2 = arith.constant 0 : index
    %12 = vector.load %arg2[%c0_1, %c0_2] : memref<256x128xbf16, #tpu.memory_space<vmem>>, vector<256x128xbf16>
    %cst = arith.constant dense<0.000000e+00> : vector<16x128xf32>
    %13 = tpu.matmul %11, %12, %cst {dimension_numbers = #tpu.dot_dimension_numbers<[1], [0], [0], [1], [0, 0, 1, 1], [], []>} : vector<16x256xbf16>, vector<256x128xbf16>, vector<16x128xf32> -> vector<16x128xf32>
    %c0_3 = arith.constant 0 : index
    %c0_4 = arith.constant 0 : index
    %14 = vector.load %arg3[%c0_3, %c0_4] : memref<16x128xf32, #tpu.memory_space<vmem>>, vector<16x128xf32>
    tpu.vector_store %arg3[%c0_3, %c0_4], %13 {strides = array<i32>} : memref<16x128xf32, #tpu.memory_space<vmem>>, vector<16x128xf32>,
    return
  }
  func.func @transform_0(%arg0: i32) -> (i32, i32) {
    %c0_i32 = arith.constant 0 : i32
    %c0_i32_0 = arith.constant 0 : i32
    return %arg0, %c0_i32 : i32, i32
  }
  func.func @transform_1(%arg0: i32) -> (i32, i32) {
    %c0_i32 = arith.constant 0 : i32
    %c0_i32_0 = arith.constant 0 : i32
    %c0_i32_1 = arith.constant 0 : i32
    return %c0_i32, %c0_i32_0 : i32, i32
  }
  func.func @transform_2(%arg0: i32) -> (i32, i32) {
    %c0_i32 = arith.constant 0 : i32
    %c0_i32_0 = arith.constant 0 : i32
    return %arg0, %c0_i32 : i32, i32
  }
}

</mosaic_0001>

<llo_original>
// kernel: tpu_custom_call.1
$region0: #{tpu_custom_call.1}
  #allocation0 [shape = 'u32[]', space=smem, size = 0x4, offset = 0x4, fixed_abs, tag = 'smem constant byte address 0x4 - core index']
  #allocation1 [shape = 'u32[144,128]{1,0:T(1,128)}', space=vmem, size = 0x12000, scoped, tag = 'internal scratch']
  %s0 = inlined_call_operand.vmem [shape: s32[16,2], index: 0, kind: input, shape index: {}]
  %s1 = inlined_call_operand.hbm [shape: bf16[256,128], index: 1, kind: input, shape index: {}]
  %s2 = inlined_call_operand.hbm [shape: f32[16,128], index: 2, kind: output, shape index: {}]
  %s3 = sld [smem:[#allocation0]]
  $region22: #{tpu_custom_call.1} parent=0
    _
  %s5 = ssub.s32 1, %s3
  %s6 = scalar_select 0, %s5, %s3
  $region1: #{tpu_custom_call.1} parent=0
    #allocation2 [shape = 'u8[65536]{0}', space=vmem, size = 0x10000, scoped, tag = 'input window, operand 1, single buffered']
    #allocation3 [shape = 's32[1]{0}', space=sflag, size = 0x4, scoped, tag = 'scoped memory for tpu_custom_call.1']
    #allocation4 [shape = 's32[1]{0}', space=sflag, size = 0x4, scoped, tag = 'scoped memory for tpu_custom_call.1']
    #allocation5 [shape = 'u8[8192]{0}', space=vmem, size = 0x2000, scoped, tag = 'output window, operand 0, single buffered']
    %7 = vsyncpa [#allocation3], 0
    %8 = vsyncpa [#allocation4], 0
    // Predicated region
    $region2: #{tpu_custom_call.1} parent=1 // pred_check
      _
    $region3: #{tpu_custom_call.1} parent=1 // pred_check_branch
      %10 = sbr.rel (0) target = $region5
    $region4: #{tpu_custom_call.1} parent=1 // pred_region
      _
    $region5: #{tpu_custom_call.1} parent=1 // pred_fallthru
      _
    // Predicated region
    $region6: #{tpu_custom_call.1} parent=1 // pred_check
      _
    $region7: #{tpu_custom_call.1} parent=1 // pred_check_branch
      %12 = sbr.rel (0) target = $region9
    $region8: #{tpu_custom_call.1} parent=1 // pred_region
      %s14 = ssub.s32 2048, 2048
      %15 = vsyncadd [#allocation3], %s14
      %s16 = sshll.u32 [#allocation2], 4
      %s17 = int_to_ptr.vmem [resolvable:$true] %s16
      %22 = dma.hbm_to_vmem [thread:$0]  %s1, 2048, %s17, [#allocation3], 64, 64, 4
    $region9: #{tpu_custom_call.1} parent=1 // pred_fallthru
      _
    // Predicated region
    $region10: #{tpu_custom_call.1} parent=1 // pred_check
      _
    $region11: #{tpu_custom_call.1} parent=1 // pred_check_branch
      %24 = sbr.rel (0) target = $region13
    $region12: #{tpu_custom_call.1} parent=1 // pred_region
      %25 = dma.done [#allocation3], 2048
    $region13: #{tpu_custom_call.1} parent=1 // pred_fallthru
      _
    %v27 = vld [vmem:[%s0] sm:$0xff]
    %v28 = vld [vmem:[%s0 + $0x8] sm:$0xff]
    %v29 = vlaneseq
    %v30 = vand.u32 %v29, 127
    %v31 = vadd.s32 %v30, 128
    %32 = vset.pattern.permute.xlu0 0
    %33 = vperm.xlu0 %32, %v27
    %v34 = vpop.permute.xlu0 %33
    %35 = vset.pattern.permute.xlu0 0
    %36 = vperm.xlu0 %35, %v28
    %v37 = vpop.permute.xlu0 %36
    %vm38 = vcmp.eq.s32.totalorder %v30, %v34
    %vm39 = vcmp.eq.s32.totalorder %v31, %v34
    %vm40 = vcmp.eq.s32.totalorder %v30, %v37
    %vm41 = vcmp.eq.s32.totalorder %v31, %v37
    %42 = vset.pattern.permute.xlu0 1
    %43 = vperm.xlu0 %42, %v27
    %v44 = vpop.permute.xlu0 %43
    %45 = vset.pattern.permute.xlu0 1
    %46 = vperm.xlu0 %45, %v28
    %v47 = vpop.permute.xlu0 %46
    %vm48 = vcmp.eq.s32.totalorder %v30, %v44
    %vm49 = vcmp.eq.s32.totalorder %v31, %v44
    %vm50 = vcmp.eq.s32.totalorder %v30, %v47
    %vm51 = vcmp.eq.s32.totalorder %v31, %v47
    %vm52 = vmor %vm38, %vm48
    %vm53 = vmor %vm39, %vm49
    %vm54 = vmor %vm40, %vm50
    %vm55 = vmor %vm41, %vm51
    %v56 = vsel %vm52, 1, 0
    %v57 = vsel %vm53, 1, 0
    %v58 = vsel %vm54, 1, 0
    %v59 = vsel %vm55, 1, 0
    %v60 = vcvt.s32.f32 %v56
    %v61 = vcvt.s32.f32 %v57
    %v62 = vcvt.s32.f32 %v58
    %v63 = vcvt.s32.f32 %v59
    %v64 = vpack.c.bf16 %v62, %v60
    %v65 = vpack.c.bf16 %v63, %v61
    %v66 = vld [vmem:[#allocation2] sm:$0xf]
    %v67 = vld [vmem:[#allocation2 + $0x4] sm:$0xf]
    %v68 = vld [vmem:[#allocation2 + $0x8] sm:$0xf]
    %v69 = vld [vmem:[#allocation2 + $0xc] sm:$0xf]
    %v70 = vld [vmem:[#allocation2 + $0x10] sm:$0xf]
    %v71 = vld [vmem:[#allocation2 + $0x14] sm:$0xf]
    %v72 = vld [vmem:[#allocation2 + $0x18] sm:$0xf]
    %v73 = vld [vmem:[#allocation2 + $0x1c] sm:$0xf]
    %v74 = vld [vmem:[#allocation2 + $0x20] sm:$0xf]
    %v75 = vld [vmem:[#allocation2 + $0x24] sm:$0xf]
    %v76 = vld [vmem:[#allocation2 + $0x28] sm:$0xf]
    %v77 = vld [vmem:[#allocation2 + $0x2c] sm:$0xf]
    %v78 = vld [vmem:[#allocation2 + $0x30] sm:$0xf]
    %v79 = vld [vmem:[#allocation2 + $0x34] sm:$0xf]
    %v80 = vld [vmem:[#allocation2 + $0x38] sm:$0xf]
    %v81 = vld [vmem:[#allocation2 + $0x3c] sm:$0xf]
    %v82 = vld [vmem:[#allocation2 + $0x40] sm:$0xf]
    %v83 = vld [vmem:[#allocation2 + $0x44] sm:$0xf]
    %v84 = vld [vmem:[#allocation2 + $0x48] sm:$0xf]
    %v85 = vld [vmem:[#allocation2 + $0x4c] sm:$0xf]
    %v86 = vld [vmem:[#allocation2 + $0x50] sm:$0xf]
    %v87 = vld [vmem:[#allocation2 + $0x54] sm:$0xf]
    %v88 = vld [vmem:[#allocation2 + $0x58] sm:$0xf]
    %v89 = vld [vmem:[#allocation2 + $0x5c] sm:$0xf]
    %v90 = vld [vmem:[#allocation2 + $0x60] sm:$0xf]
    %v91 = vld [vmem:[#allocation2 + $0x64] sm:$0xf]
    %v92 = vld [vmem:[#allocation2 + $0x68] sm:$0xf]
    %v93 = vld [vmem:[#allocation2 + $0x6c] sm:$0xf]
    %v94 = vld [vmem:[#allocation2 + $0x70] sm:$0xf]
    %v95 = vld [vmem:[#allocation2 + $0x74] sm:$0xf]
    %v96 = vld [vmem:[#allocation2 + $0x78] sm:$0xf]
    %v97 = vld [vmem:[#allocation2 + $0x7c] sm:$0xf]
    %v130 = vunpack.c.l.b16 %v66
    %v131 = vunpack.c.l.b16 %v67
    %v132 = vunpack.c.l.b16 %v68
    %v133 = vunpack.c.l.b16 %v69
    %v134 = vunpack.c.l.b16 %v70
    %v135 = vunpack.c.l.b16 %v71
    %v136 = vunpack.c.l.b16 %v72
    %v137 = vunpack.c.l.b16 %v73
    %v138 = vunpack.c.l.b16 %v74
    %v139 = vunpack.c.l.b16 %v75
    %v140 = vunpack.c.l.b16 %v76
    %v141 = vunpack.c.l.b16 %v77
    %v142 = vunpack.c.l.b16 %v78
    %v143 = vunpack.c.l.b16 %v79
    %v144 = vunpack.c.l.b16 %v80
    %v145 = vunpack.c.l.b16 %v81
    %v146 = vunpack.c.l.b16 %v82
    %v147 = vunpack.c.l.b16 %v83
    %v148 = vunpack.c.l.b16 %v84
    %v149 = vunpack.c.l.b16 %v85
    %v150 = vunpack.c.l.b16 %v86
    %v151 = vunpack.c.l.b16 %v87
    %v152 = vunpack.c.l.b16 %v88
    %v153 = vunpack.c.l.b16 %v89
    %v154 = vunpack.c.l.b16 %v90
    %v155 = vunpack.c.l.b16 %v91
    %v156 = vunpack.c.l.b16 %v92
    %v157 = vunpack.c.l.b16 %v93
    %v158 = vunpack.c.l.b16 %v94
    %v159 = vunpack.c.l.b16 %v95
    %v160 = vunpack.c.l.b16 %v96
    %v161 = vunpack.c.l.b16 %v97
    %v162 = vpack.c.b16 %v131, %v130
    %v163 = vpack.c.b16 %v133, %v132
    %v164 = vpack.c.b16 %v135, %v134
    %v165 = vpack.c.b16 %v137, %v136
    %v166 = vpack.c.b16 %v139, %v138
    %v167 = vpack.c.b16 %v141, %v140
    %v168 = vpack.c.b16 %v143, %v142
    %v169 = vpack.c.b16 %v145, %v144
    %v170 = vpack.c.b16 %v147, %v146
    %v171 = vpack.c.b16 %v149, %v148
    %v172 = vpack.c.b16 %v151, %v150
    %v173 = vpack.c.b16 %v153, %v152
    %v174 = vpack.c.b16 %v155, %v154
    %v175 = vpack.c.b16 %v157, %v156
    %v176 = vpack.c.b16 %v159, %v158
    %v177 = vpack.c.b16 %v161, %v160
    %194 = vmatprep.subr.bf16.mxu0 0
    %195 = vmatpush1.bf16.msra.mxu0 %v169
    %196 = vmatprep.subr.bf16.mxu0 0
    %197 = vmatpush1.bf16.msra.mxu0 %v168
    %198 = vmatprep.subr.bf16.mxu0 0
    %199 = vmatpush1.bf16.msra.mxu0 %v167
    %200 = vmatprep.subr.bf16.mxu0 0
    %201 = vmatpush1.bf16.msra.mxu0 %v166
    %202 = vmatprep.subr.bf16.mxu0 0
    %203 = vmatpush1.bf16.msra.mxu0 %v165
    %204 = vmatprep.subr.bf16.mxu0 0
    %205 = vmatpush1.bf16.msra.mxu0 %v164
    %206 = vmatprep.subr.bf16.mxu0 0
    %207 = vmatpush1.bf16.msra.mxu0 %v163
    %208 = vmatprep.subr.bf16.mxu0 0
    %209 = vmatpush1.bf16.msra.mxu0 %v162
    %210 = vmatprep.subr.bf16.mxu0 0
    %211 = vmatpush2.bf16.msra.mxu0 %v177
    %212 = vmatprep.subr.bf16.mxu0 0
    %213 = vmatpush2.bf16.msra.mxu0 %v176
    %214 = vmatprep.subr.bf16.mxu0 0
    %215 = vmatpush2.bf16.msra.mxu0 %v175
    %216 = vmatprep.subr.bf16.mxu0 0
    %217 = vmatpush2.bf16.msra.mxu0 %v174
    %218 = vmatprep.subr.bf16.mxu0 0
    %219 = vmatpush2.bf16.msra.mxu0 %v173
    %220 = vmatprep.subr.bf16.mxu0 0
    %221 = vmatpush2.bf16.msra.mxu0 %v172
    %222 = vmatprep.subr.bf16.mxu0 0
    %223 = vmatpush2.bf16.msra.mxu0 %v171
    %224 = vmatprep.subr.bf16.mxu0 0
    %225 = vmatpush2.bf16.msra.mxu0 %v170
    %226 = vmatprep.mubr.bf16.mxu0 %v65
    %227 = vmatmul.mubr.bf16.gmra.mxu0 %v64
    %v228 = vpop.f32.mrf.mxu0
    %v229 = vadd.f32 0.0, %v228
    %v230 = vpop.f32.mrf.mxu0
    %v231 = vpop.f32.mrf.mxu0
    %v232 = vadd.f32 0.0, %v231
    %v233 = vpop.f32.mrf.mxu0
    %234 = vdwg.mxu0
    %235 = vst [vmem:[#allocation5] sm:$0xff] %v229
    %236 = vst [vmem:[#allocation5 + $0x8] sm:$0xff] %v232
    // Predicated region
    $region14: #{tpu_custom_call.1} parent=1 // pred_check
      _
    $region15: #{tpu_custom_call.1} parent=1 // pred_check_branch
      %238 = sbr.rel (0) target = $region17
    $region16: #{tpu_custom_call.1} parent=1 // pred_region
      %s240 = ssub.s32 256, 256
      %241 = vsyncadd [#allocation4], %s240
      %s242 = sshll.u32 [#allocation5], 4
      %s243 = int_to_ptr.vmem [resolvable:$true] %s242
      %248 = dma.vmem_to_hbm [thread:$0]  %s243, 256, %s2, [#allocation4], 128, 128, 8
    $region17: #{tpu_custom_call.1} parent=1 // pred_fallthru
      _
    // Predicated region
    $region18: #{tpu_custom_call.1} parent=1 // pred_check
      _
    $region19: #{tpu_custom_call.1} parent=1 // pred_check_branch
      %250 = sbr.rel (0) target = $region21
    $region20: #{tpu_custom_call.1} parent=1 // pred_region
      %251 = dma.done [#allocation4], 256
    $region21: #{tpu_custom_call.1} parent=1 // pred_fallthru
      _
    %252 = vsyncpa [#allocation3], 1
    %253 = vsyncpa [#allocation4], 1

</llo_original>
